<compile_context>
chip_gen: v7x
topology: tpu7x:2x2x1
jax: 0.10.0
libtpu: 0.0.40
codegen_flags: <defaults>
</compile_context>

<pallas_src>
import functools

import jax
import jax.numpy as jnp
from jax.experimental import pallas as pl
from jax.experimental.pallas import tpu as pltpu


def _token_select_kernel(x_ref, w1_ref, b1_ref, w2_ref, b2_ref, *rest,
                         tau, is_hard, threshold, training):
    if training:
        noise_ref, out_ref = rest
    else:
        (out_ref,) = rest

    # --- MLP head: Linear(D -> H) + ReLU + Linear(H -> 1) ---
    x = x_ref[...].astype(jnp.float32)                                   # (TN, D)
    h = jnp.dot(x, w1_ref[...], preferred_element_type=jnp.float32)      # (TN, H)
    h = jnp.maximum(h + b1_ref[...], 0.0)
    # H = D // 16 is tiny: do the H->1 projection on the VPU/XLU (free slots)
    # instead of a 1-wide, heavily padded MXU matmul.
    logits = jnp.sum(h * w2_ref[...], axis=-1, keepdims=True) + b2_ref[...]  # (TN, 1)

    # --- gumbel-sigmoid gate ---
    if training:
        # noise_ref holds Logistic(0,1) samples == Gumbel1 - Gumbel2
        z = (logits + noise_ref[...]) * (1.0 / tau)
    else:
        z = logits
    y_soft = jax.nn.sigmoid(z)

    if is_hard:
        # TODO(synk): the straight-through gradient (y_hard - sg(y_soft) + y_soft)
        # needs a custom_vjp around pallas_call; the forward value is y_hard.
        gate = jnp.where(y_soft > threshold, 1.0, 0.0)
    else:
        gate = y_soft

    out_ref[:, 0:1] = gate.astype(out_ref.dtype)
    out_ref[:, 1:2] = logits.astype(out_ref.dtype)


def _round_up(n, m):
    return ((n + m - 1) // m) * m


def token_select(x, w1, b1, w2, b2, *, tau=5.0, is_hard=True, threshold=0.5,
                 training=False, seed=0, tn=None):
    """x: (B, L, D); w1: (H, D); b1: (H,); w2: (1, H); b2: (1,).

    Returns (token_select, logits), each (B, L, 1) float32, matching
    TokenSelect.forward semantics (forward values only).
    """
    B, L, D = x.shape
    H = w1.shape[0]
    N = B * L

    # ---- token-tile size: as big as the VMEM traffic budget allows ----
    if tn is None:
        budget = 12 * 1024 * 1024                 # bytes of double-buffered traffic
        x_bytes = D * jnp.dtype(x.dtype).itemsize
        per_token = 2 * (x_bytes + 4 + 8)         # 2x (x row + noise + merged out)
        tn = budget // max(per_token, 1)
        tn = max(256, min(2048, (tn // 256) * 256))
    tn = min(tn, _round_up(N, 8))                 # don't over-pad tiny problems
    tn = max(8, (tn // 8) * 8)
    n_pad = _round_up(N, tn)

    # ---- wrapper-side layout prep (keep x in its native dtype) ----
    x_flat = x.reshape(N, D)
    if n_pad != N:
        x_flat = jnp.pad(x_flat, ((0, n_pad - N), (0, 0)))

    w1_t = w1.T.astype(jnp.float32)                  # (D, H)
    b1_r = b1.reshape(1, H).astype(jnp.float32)      # (1, H)
    w2_r = w2.reshape(1, H).astype(jnp.float32)      # (1, H)
    b2_r = b2.reshape(1, 1).astype(jnp.float32)      # (1, 1)

    operands = [x_flat, w1_t, b1_r, w2_r, b2_r]
    in_specs = [
        pl.BlockSpec((tn, D), lambda i: (i, 0)),     # x tile (tokens x features)
        pl.BlockSpec((D, H), lambda i: (0, 0)),      # W1^T (whole, constant)
        pl.BlockSpec((1, H), lambda i: (0, 0)),      # b1
        pl.BlockSpec((1, H), lambda i: (0, 0)),      # W2 row
        pl.BlockSpec((1, 1), lambda i: (0, 0)),      # b2
    ]
    if training:
        # Gumbel(0,1) - Gumbel(0,1) is exactly Logistic(0,1): one draw, not two.
        noise = jax.random.logistic(jax.random.PRNGKey(seed), (n_pad, 1), jnp.float32)
        operands.append(noise)
        in_specs.append(pl.BlockSpec((tn, 1), lambda i: (i, 0)))

    kernel = functools.partial(_token_select_kernel, tau=float(tau),
                               is_hard=bool(is_hard), threshold=float(threshold),
                               training=bool(training))

    out = pl.pallas_call(
        kernel,
        out_shape=jax.ShapeDtypeStruct((n_pad, 2), jnp.float32),
        grid=(n_pad // tn,),
        in_specs=in_specs,
        out_specs=pl.BlockSpec((tn, 2), lambda i: (i, 0)),    # [gate | logits]
        compiler_params=pltpu.CompilerParams(
            dimension_semantics=("parallel",),                # shard across TCs (v7x)
            vmem_limit_bytes=32 * 1024 * 1024),               # safe on v5e/v6e/v7x
    )(*operands)

    ts = out[:N, 0:1].reshape(B, L, 1)
    logits = out[:N, 1:2].reshape(B, L, 1)
    return ts, logits


if __name__ == "__main__":
    key = jax.random.PRNGKey(0)
    B, L, D = 2, 16, 64            # dim_in = 64 -> hidden = 64 // 16 = 4
    H = D // 16

    k1, k2, k3, k4, k5 = jax.random.split(key, 5)
    x = jax.random.normal(k1, (B, L, D), jnp.float32)
    # deterministic, PyTorch-Linear-like uniform init
    bound1 = 1.0 / (D ** 0.5)
    w1 = jax.random.uniform(k2, (H, D), jnp.float32, -bound1, bound1)
    b1 = jax.random.uniform(k3, (H,), jnp.float32, -bound1, bound1)
    bound2 = 1.0 / (H ** 0.5)
    w2 = jax.random.uniform(k4, (1, H), jnp.float32, -bound2, bound2)
    b2 = jax.random.uniform(k5, (1,), jnp.float32, -bound2, bound2)

    # --- eval mode (deterministic): check against pure-JAX reference ---
    ts, logits = token_select(x, w1, b1, w2, b2, tau=5.0, is_hard=True,
                              threshold=0.5, training=False, seed=0)
    jax.block_until_ready((ts, logits))

    ref_logits = jnp.maximum(x @ w1.T + b1, 0.0) @ w2.T + b2
    ref_ts = (jax.nn.sigmoid(ref_logits) > 0.5).astype(jnp.float32)
    assert jnp.allclose(logits, ref_logits, atol=2e-4, rtol=1e-4), "logits mismatch"
    near_boundary = jnp.abs(ref_logits) < 1e-3
    assert jnp.all((ts == ref_ts) | near_boundary), "token_select mismatch"

    # --- training mode (logistic noise; stochastic gate, deterministic logits) ---
    ts_tr, logits_tr = token_select(x, w1, b1, w2, b2, tau=5.0, is_hard=True,
                                    threshold=0.5, training=True, seed=1234)
    jax.block_until_ready((ts_tr, logits_tr))
    assert jnp.allclose(logits_tr, ref_logits, atol=2e-4, rtol=1e-4)
    assert jnp.all((ts_tr == 0.0) | (ts_tr == 1.0))

    print("KERNEL_OK")
</pallas_src>

<mosaic_0001>
module attributes {stable_mosaic.version = 11 : i64} {
  func.func @_token_select_kernel(%arg0: i32, %arg1: memref<32x64xf32, #tpu.memory_space<vmem>>, %arg2: memref<64x4xf32, #tpu.memory_space<vmem>>, %arg3: memref<1x4xf32, #tpu.memory_space<vmem>>, %arg4: memref<1x4xf32, #tpu.memory_space<vmem>>, %arg5: memref<1x1xf32, #tpu.memory_space<vmem>>, %arg6: memref<32x2xf32, #tpu.memory_space<vmem>>) attributes {dimension_semantics = [#tpu.dimension_semantics<parallel>], iteration_bounds = array<i64: 1>, scalar_prefetch = 0 : i64, scratch_operands = 0 : i64, tpu.core_type = #tpu.core_type<tc>, window_params = [{transform_indices = @transform_0, window_bounds = array<i64: 32, 64>}, {pipeline_mode = #tpu.pipeline_mode<synchronous>, transform_indices = @transform_1, window_bounds = array<i64: 64, 4>}, {pipeline_mode = #tpu.pipeline_mode<synchronous>, transform_indices = @transform_2, window_bounds = array<i64: 1, 4>}, {pipeline_mode = #tpu.pipeline_mode<synchronous>, transform_indices = @transform_3, window_bounds = array<i64: 1, 4>}, {pipeline_mode = #tpu.pipeline_mode<synchronous>, transform_indices = @transform_4, window_bounds = array<i64: 1, 1>}, {transform_indices = @transform_5, window_bounds = array<i64: 32, 2>}]} {
    %c0 = arith.constant 0 : index
    %c0_0 = arith.constant 0 : index
    %0 = vector.load %arg1[%c0, %c0_0] : memref<32x64xf32, #tpu.memory_space<vmem>>, vector<32x64xf32>
    %c0_1 = arith.constant 0 : index
    %c0_2 = arith.constant 0 : index
    %1 = vector.load %arg2[%c0_1, %c0_2] : memref<64x4xf32, #tpu.memory_space<vmem>>, vector<64x4xf32>
    %cst = arith.constant dense<0.000000e+00> : vector<32x4xf32>
    %2 = tpu.matmul %0, %1, %cst {dimension_numbers = #tpu.dot_dimension_numbers<[1], [0], [0], [1], [0, 0, 1, 1], [], []>} : vector<32x64xf32>, vector<64x4xf32>, vector<32x4xf32> -> vector<32x4xf32>
    %c0_3 = arith.constant 0 : index
    %c0_4 = arith.constant 0 : index
    %3 = vector.load %arg3[%c0_3, %c0_4] : memref<1x4xf32, #tpu.memory_space<vmem>>, vector<1x4xf32>
    %4 = vector.broadcast %3 : vector<1x4xf32> to vector<32x4xf32>
    %5 = arith.addf %2, %4 : vector<32x4xf32>
    %cst_5 = arith.constant 0.000000e+00 : f32
    %6 = vector.broadcast %cst_5 : f32 to vector<32x4xf32>
    %7 = arith.maximumf %5, %6 : vector<32x4xf32>
    %c0_6 = arith.constant 0 : index
    %c0_7 = arith.constant 0 : index
    %8 = vector.load %arg4[%c0_6, %c0_7] : memref<1x4xf32, #tpu.memory_space<vmem>>, vector<1x4xf32>
    %9 = vector.broadcast %8 : vector<1x4xf32> to vector<32x4xf32>
    %10 = arith.mulf %7, %9 : vector<32x4xf32>
    %cst_8 = arith.constant dense<0.000000e+00> : vector<32xf32>
    %11 = vector.multi_reduction <add>, %10, %cst_8 [1] : vector<32x4xf32> to vector<32xf32>
    %12 = vector.shape_cast %11 : vector<32xf32> to vector<32x1xf32>
    %c0_9 = arith.constant 0 : index
    %c0_10 = arith.constant 0 : index
    %13 = vector.load %arg5[%c0_9, %c0_10] : memref<1x1xf32, #tpu.memory_space<vmem>>, vector<1x1xf32>
    %14 = vector.broadcast %13 : vector<1x1xf32> to vector<32x1xf32>
    %15 = arith.addf %12, %14 : vector<32x1xf32>
    %16 = arith.negf %15 : vector<32x1xf32>
    %17 = math.exp %16 : vector<32x1xf32>
    %cst_11 = arith.constant 1.000000e+00 : f32
    %18 = vector.broadcast %cst_11 : f32 to vector<32x1xf32>
    %19 = arith.addf %18, %17 : vector<32x1xf32>
    %20 = arith.divf %18, %19 : vector<32x1xf32>
    %cst_12 = arith.constant 5.000000e-01 : f32
    %21 = vector.broadcast %cst_12 : f32 to vector<32x1xf32>
    %22 = arith.cmpf ogt, %20, %21 : vector<32x1xf32>
    %cst_13 = arith.constant 1.000000e+00 : f32
    %cst_14 = arith.constant 0.000000e+00 : f32
    %23 = vector.broadcast %cst_13 : f32 to vector<32x1xf32>
    %24 = vector.broadcast %cst_14 : f32 to vector<32x1xf32>
    %25 = arith.select %22, %23, %24 : vector<32x1xi1>, vector<32x1xf32>
    %c0_15 = arith.constant 0 : index
    %c0_16 = arith.constant 0 : index
    %26 = vector.load %arg6[%c0_15, %c0_16] : memref<32x2xf32, #tpu.memory_space<vmem>>, vector<32x1xf32>
    tpu.vector_store %arg6[%c0_15, %c0_16], %25 {strides = array<i32>} : memref<32x2xf32, #tpu.memory_space<vmem>>, vector<32x1xf32>,
    %c0_17 = arith.constant 0 : index
    %c1 = arith.constant 1 : index
    %27 = vector.load %arg6[%c0_17, %c1] : memref<32x2xf32, #tpu.memory_space<vmem>>, vector<32x1xf32>
    tpu.vector_store %arg6[%c0_17, %c1], %15 {strides = array<i32>} : memref<32x2xf32, #tpu.memory_space<vmem>>, vector<32x1xf32>,
    return
  }
  func.func @transform_0(%arg0: i32) -> (i32, i32) {
    %c0_i32 = arith.constant 0 : i32
    %c0_i32_0 = arith.constant 0 : i32
    return %arg0, %c0_i32 : i32, i32
  }
  func.func @transform_1(%arg0: i32) -> (i32, i32) {
    %c0_i32 = arith.constant 0 : i32
    %c0_i32_0 = arith.constant 0 : i32
    %c0_i32_1 = arith.constant 0 : i32
    return %c0_i32, %c0_i32_0 : i32, i32
  }
  func.func @transform_2(%arg0: i32) -> (i32, i32) {
    %c0_i32 = arith.constant 0 : i32
    %c0_i32_0 = arith.constant 0 : i32
    %c0_i32_1 = arith.constant 0 : i32
    return %c0_i32, %c0_i32_0 : i32, i32
  }
  func.func @transform_3(%arg0: i32) -> (i32, i32) {
    %c0_i32 = arith.constant 0 : i32
    %c0_i32_0 = arith.constant 0 : i32
    %c0_i32_1 = arith.constant 0 : i32
    return %c0_i32, %c0_i32_0 : i32, i32
  }
  func.func @transform_4(%arg0: i32) -> (i32, i32) {
    %c0_i32 = arith.constant 0 : i32
    %c0_i32_0 = arith.constant 0 : i32
    %c0_i32_1 = arith.constant 0 : i32
    return %c0_i32, %c0_i32_0 : i32, i32
  }
  func.func @transform_5(%arg0: i32) -> (i32, i32) {
    %c0_i32 = arith.constant 0 : i32
    %c0_i32_0 = arith.constant 0 : i32
    return %arg0, %c0_i32 : i32, i32
  }
}

</mosaic_0001>

<llo_original>
// kernel: tpu_custom_call.1
$region0: #{tpu_custom_call.1}
  #allocation0 [shape = 'u32[]', space=smem, size = 0x4, offset = 0x4, fixed_abs, tag = 'smem constant byte address 0x4 - core index']
  #allocation1 [shape = 'u32[144,128]{1,0:T(1,128)}', space=vmem, size = 0x12000, scoped, tag = 'internal scratch']
  #allocation2 [shape = 'f32[1,1]{1,0:T(1,128)S(1)}', space=vmem, size = 0x200, scoped, tag = 'scoped memory for tpu_custom_call.1']
  %s0 = inlined_call_operand.vmem [shape: f32[32,64], index: 0, kind: input, shape index: {}]
  %s1 = inlined_call_operand.vmem [shape: f32[64,4], index: 1, kind: input, shape index: {}]
  %s2 = inlined_call_operand.vmem [shape: f32[1,4], index: 2, kind: input, shape index: {}]
  %s3 = inlined_call_operand.vmem [shape: f32[1,4], index: 3, kind: input, shape index: {}]
  %s4 = inlined_call_operand.<no memory space> [shape: f32[1,1], index: 4, kind: input, shape index: {}]
  %s5 = inlined_call_operand.vmem [shape: f32[32,2], index: 5, kind: output, shape index: {}]
  %s6 = sld [smem:[#allocation0]]
  $region30: #{tpu_custom_call.1} parent=0
    _
  %s8 = ssub.s32 1, %s6
  %s9 = scalar_select 0, %s8, %s6
  %v10 = vstv %s4
  %11 = vst [vmem:[#allocation2] sm:$0x1] %v10
  // Predicated region
  $region2: #{tpu_custom_call.1} parent=0 // pred_check
    _
  $region3: #{tpu_custom_call.1} parent=0 // pred_check_branch
    %13 = sbr.rel (0) target = $region5
  $region4: #{tpu_custom_call.1} parent=0 // pred_region
    _
  $region5: #{tpu_custom_call.1} parent=0 // pred_fallthru
    _
  // Predicated region
  $region6: #{tpu_custom_call.1} parent=0 // pred_check
    _
  $region7: #{tpu_custom_call.1} parent=0 // pred_check_branch
    %15 = sbr.rel (0) target = $region9
  $region8: #{tpu_custom_call.1} parent=0 // pred_region
    _
  $region9: #{tpu_custom_call.1} parent=0 // pred_fallthru
    _
  // Predicated region
  $region10: #{tpu_custom_call.1} parent=0 // pred_check
    _
  $region11: #{tpu_custom_call.1} parent=0 // pred_check_branch
    %17 = sbr.rel (0) target = $region13
  $region12: #{tpu_custom_call.1} parent=0 // pred_region
    _
  $region13: #{tpu_custom_call.1} parent=0 // pred_fallthru
    _
  // Predicated region
  $region14: #{tpu_custom_call.1} parent=0 // pred_check
    _
  $region15: #{tpu_custom_call.1} parent=0 // pred_check_branch
    %19 = sbr.rel (0) target = $region17
  $region16: #{tpu_custom_call.1} parent=0 // pred_region
    _
  $region17: #{tpu_custom_call.1} parent=0 // pred_fallthru
    _
  // Predicated region
  $region18: #{tpu_custom_call.1} parent=0 // pred_check
    _
  $region19: #{tpu_custom_call.1} parent=0 // pred_check_branch
    %21 = sbr.rel (0) target = $region21
  $region20: #{tpu_custom_call.1} parent=0 // pred_region
    _
  $region21: #{tpu_custom_call.1} parent=0 // pred_fallthru
    _
  %v22 = vld [vmem:[%s0] sm:$0xff]
  %v23 = vld [vmem:[%s0 + $0x8] sm:$0xff]
  %v24 = vld [vmem:[%s0 + $0x10] sm:$0xff]
  %v25 = vld [vmem:[%s0 + $0x18] sm:$0xff]
  %v26 = vld [vmem:[%s1] sm:$0xff]
  %v27 = vld [vmem:[%s1 + $0x8] sm:$0xff]
  %v28 = vld [vmem:[%s1 + $0x10] sm:$0xff]
  %v29 = vld [vmem:[%s1 + $0x18] sm:$0xff]
  %v30 = vld [vmem:[%s1 + $0x20] sm:$0xff]
  %v31 = vld [vmem:[%s1 + $0x28] sm:$0xff]
  %v32 = vld [vmem:[%s1 + $0x30] sm:$0xff]
  %v33 = vld [vmem:[%s1 + $0x38] sm:$0xff]
  %v34 = vld [vmem:[%s2] sm:$0x1]
  %v36 = vlaneseq
  %v37 = vshrl.u32 %v36, 7
  %v38 = vsub.s32 0, %v37
  %v39 = vrot.slane %v34, %v38
  %vm41 = vcmask 523264
  %v43 = vsel %vm41, %v22, 0
  %v46 = vsel %vm41, %v23, 0
  %v49 = vsel %vm41, %v24, 0
  %v52 = vsel %vm41, %v25, 0
  %54 = vmatprep.subr.mxu0 0.0
  %55 = vmatpush1.msra.mxu0 %v26
  %56 = vmatprep.subr.mxu0 0.0
  %57 = vmatpush1.msra.mxu0 %v27
  %58 = vmatprep.subr.mxu0 0.0
  %59 = vmatpush1.msra.mxu0 %v28
  %60 = vmatprep.subr.mxu0 0.0
  %61 = vmatpush1.msra.mxu0 %v29
  %62 = vmatprep.subr.mxu0 0.0
  %63 = vmatpush1.msra.mxu0 %v30
  %64 = vmatprep.subr.mxu0 0.0
  %65 = vmatpush1.msra.mxu0 %v31
  %66 = vmatprep.subr.mxu0 0.0
  %67 = vmatpush1.msra.mxu0 %v32
  %68 = vmatprep.subr.mxu0 0.0
  %69 = vmatpush1.msra.mxu0 %v33
  %70 = vmatprep.subr.mxu0 0.0
  %71 = vmatpush1.msra.mxu0 0.0
  %72 = vmatprep.subr.mxu0 0.0
  %73 = vmatpush1.msra.mxu0 0.0
  %74 = vmatprep.subr.mxu0 0.0
  %75 = vmatpush1.msra.mxu0 0.0
  %76 = vmatprep.subr.mxu0 0.0
  %77 = vmatpush1.msra.mxu0 0.0
  %78 = vmatprep.subr.mxu0 0.0
  %79 = vmatpush1.msra.mxu0 0.0
  %80 = vmatprep.subr.mxu0 0.0
  %81 = vmatpush1.msra.mxu0 0.0
  %82 = vmatprep.subr.mxu0 0.0
  %83 = vmatpush1.msra.mxu0 0.0
  %84 = vmatprep.subr.mxu0 0.0
  %85 = vmatpush1.msra.mxu0 0.0
  %86 = vmatprep.subr.mxu0 0.0
  %87 = vmatpush1.msra.mxu0 0.0
  %88 = vmatprep.subr.mxu0 0.0
  %89 = vmatpush1.msra.mxu0 0.0
  %90 = vmatprep.subr.mxu0 0.0
  %91 = vmatpush1.msra.mxu0 0.0
  %92 = vmatprep.subr.mxu0 0.0
  %93 = vmatpush1.msra.mxu0 0.0
  %94 = vmatprep.subr.mxu0 0.0
  %95 = vmatpush1.msra.mxu0 0.0
  %96 = vmatprep.subr.mxu0 0.0
  %97 = vmatpush1.msra.mxu0 0.0
  %98 = vmatprep.subr.mxu0 0.0
  %99 = vmatpush1.msra.mxu0 0.0
  %100 = vmatprep.subr.mxu0 0.0
  %101 = vmatpush1.msra.mxu0 0.0
  %102 = vmatprep.subr.mxu0 0.0
  %103 = vmatpush1.msra.mxu0 0.0
  %104 = vmatprep.subr.mxu0 0.0
  %105 = vmatpush1.msra.mxu0 0.0
  %106 = vmatprep.subr.mxu0 0.0
  %107 = vmatpush1.msra.mxu0 0.0
  %108 = vmatprep.subr.mxu0 0.0
  %109 = vmatpush1.msra.mxu0 0.0
  %110 = vmatprep.subr.mxu0 0.0
  %111 = vmatpush1.msra.mxu0 0.0
  %112 = vmatprep.subr.mxu0 0.0
  %113 = vmatpush1.msra.mxu0 0.0
  %114 = vmatprep.subr.mxu0 0.0
  %115 = vmatpush1.msra.mxu0 0.0
  %116 = vmatprep.subr.mxu0 0.0
  %117 = vmatpush1.msra.mxu0 0.0
  %118 = vmatprep.mubr.f32.mxu0 0.0
  %119 = vmatmul.mubr.f32.gmra.mrb[0].mxu0 %v43
  %v120 = vpop.f32.mrb[0].mxu0
  %v121 = vadd.f32 %v39, %v120
  %v122 = vpop.f32.mrb[0].mxu0
  %123 = vmatprep.mubr.f32.mxu0 0.0
  %124 = vmatmul.mubr.f32.gmra.mrb[0].mxu0 %v46
  %v125 = vpop.f32.mrb[0].mxu0
  %v126 = vadd.f32 %v39, %v125
  %v127 = vpop.f32.mrb[0].mxu0
  %128 = vmatprep.mubr.f32.mxu0 0.0
  %129 = vmatmul.mubr.f32.gmra.mrb[0].mxu0 %v49
  %v130 = vpop.f32.mrb[0].mxu0
  %v131 = vadd.f32 %v39, %v130
  %v132 = vpop.f32.mrb[0].mxu0
  %133 = vmatprep.mubr.f32.mxu0 0.0
  %134 = vmatmul.mubr.f32.gmra.mrb[0].mxu0 %v52
  %v135 = vpop.f32.mrb[0].mxu0
  %v136 = vadd.f32 %v39, %v135
  %v137 = vpop.f32.mrb[0].mxu0
  %138 = vdwg.mxu0
  %v139 = vmax.f32 %v121, 0.0
  %v140 = vmax.f32 %v126, 0.0
  %v141 = vmax.f32 %v131, 0.0
  %v142 = vmax.f32 %v136, 0.0
  %v143 = vld [vmem:[%s3] sm:$0x1]
  %v145 = vlaneseq
  %v146 = vshrl.u32 %v145, 7
  %v147 = vsub.s32 0, %v146
  %v148 = vrot.slane %v143, %v147
  %v150 = vmul.f32 %v139, %v148
  %v151 = vmul.f32 %v140, %v148
  %v152 = vmul.f32 %v141, %v148
  %v153 = vmul.f32 %v142, %v148
  %vm154 = vcmask 31744
  %v155 = vsel %vm154, %v150, 0.0
  %156 = vadd.xlane.f32.xlu0 %v155
  %v157 = vpop.xlane.xlu0 %156
  %v158 = vsel %vm154, %v151, 0.0
  %159 = vadd.xlane.f32.xlu0 %v158
  %v160 = vpop.xlane.xlu0 %159
  %v161 = vsel %vm154, %v152, 0.0
  %162 = vadd.xlane.f32.xlu0 %v161
  %v163 = vpop.xlane.xlu0 %162
  %v164 = vsel %vm154, %v153, 0.0
  %165 = vadd.xlane.f32.xlu0 %v164
  %v166 = vpop.xlane.xlu0 %165
  %v167 = vld [vmem:[#allocation2] sm:$0x1]
  %v169 = vlaneseq
  %v170 = vshrl.u32 %v169, 7
  %v171 = vsub.s32 0, %v170
  %v172 = vrot.slane %v167, %v171
  %v174 = vadd.f32 %v157, %v172
  %v175 = vadd.f32 %v160, %v172
  %v176 = vadd.f32 %v163, %v172
  %v177 = vadd.f32 %v166, %v172
  %v178 = vxor.u32 %v174, 2147483648
  %v179 = vxor.u32 %v175, 2147483648
  %v180 = vxor.u32 %v176, 2147483648
  %v181 = vxor.u32 %v177, 2147483648
  %v182 = vmul.f32 %v178, 1.442695
  %v183 = vpow.pop %v182
  %v184 = vmul.f32 %v179, 1.442695
  %v185 = vpow.pop %v184
  %v186 = vmul.f32 %v180, 1.442695
  %v187 = vpow.pop %v186
  %v188 = vmul.f32 %v181, 1.442695
  %v189 = vpow.pop %v188
  %v190 = vadd.f32 %v183, 1.0
  %v191 = vadd.f32 %v185, 1.0
  %v192 = vadd.f32 %v187, 1.0
  %v193 = vadd.f32 %v189, 1.0
  %v194 = vrcp.pop %v190
  %v195 = vmul.f32 1.0, %v194
  %v196 = vrcp.pop %v191
  %v197 = vmul.f32 1.0, %v196
  %v198 = vrcp.pop %v192
  %v199 = vmul.f32 1.0, %v198
  %v200 = vrcp.pop %v193
  %v201 = vmul.f32 1.0, %v200
  %vm202 = vcmp.gt.f32.partialorder %v195, 0.5
  %vm203 = vcmp.gt.f32.partialorder %v197, 0.5
  %vm204 = vcmp.gt.f32.partialorder %v199, 0.5
  %vm205 = vcmp.gt.f32.partialorder %v201, 0.5
  %v206 = vsel %vm202, 1.0, 0.0
  %v207 = vsel %vm203, 1.0, 0.0
  %v208 = vsel %vm204, 1.0, 0.0
  %v209 = vsel %vm205, 1.0, 0.0
  %vm210 = vcmask 7168
  %211 = vst.msk [vmem:[%s5] sm:$0xff] %vm210, %v206
  %212 = vst.msk [vmem:[%s5 + $0x8] sm:$0xff] %vm210, %v207
  %213 = vst.msk [vmem:[%s5 + $0x10] sm:$0xff] %vm210, %v208
  %214 = vst.msk [vmem:[%s5 + $0x18] sm:$0xff] %vm210, %v209
  %219 = vrot.lane.b32.xlu0 %v174, 1
  %v220 = vpop.permute.xlu0 %219
  %221 = vrot.lane.b32.xlu0 %v175, 1
  %v222 = vpop.permute.xlu0 %221
  %223 = vrot.lane.b32.xlu0 %v176, 1
  %v224 = vpop.permute.xlu0 %223
  %225 = vrot.lane.b32.xlu0 %v177, 1
  %v226 = vpop.permute.xlu0 %225
  %vm231 = vcmask 15368
  %232 = vst.msk [vmem:[%s5] sm:$0xff] %vm231, %v220
  %233 = vst.msk [vmem:[%s5 + $0x8] sm:$0xff] %vm231, %v222
  %234 = vst.msk [vmem:[%s5 + $0x10] sm:$0xff] %vm231, %v224
  %235 = vst.msk [vmem:[%s5 + $0x18] sm:$0xff] %vm231, %v226
  // Predicated region
  $region22: #{tpu_custom_call.1} parent=0 // pred_check
    _
  $region23: #{tpu_custom_call.1} parent=0 // pred_check_branch
    %237 = sbr.rel (0) target = $region25
  $region24: #{tpu_custom_call.1} parent=0 // pred_region
    _
  $region25: #{tpu_custom_call.1} parent=0 // pred_fallthru
    _
  // Predicated region
  $region26: #{tpu_custom_call.1} parent=0 // pred_check
    _
  $region27: #{tpu_custom_call.1} parent=0 // pred_check_branch
    %239 = sbr.rel (0) target = $region29
  $region28: #{tpu_custom_call.1} parent=0 // pred_region
    _
  $region29: #{tpu_custom_call.1} parent=0 // pred_fallthru
    _

</llo_original>
